<compile_context>
chip_gen: v7x
topology: tpu7x:2x2x1
jax: 0.10.0
libtpu: 0.0.40
codegen_flags: <defaults>
</compile_context>

<pallas_src>
import functools

import jax
import jax.numpy as jnp
from jax.experimental import pallas as pl
from jax.experimental.pallas import tpu as pltpu

_LANE = 128       # lane width: weight feature dims padded to this
_SUBLANE = 8      # f32 sublane width: batch tile granularity
# Request single-buffered weights only when double-buffering them costs this much.
_SINGLE_BUFFER_WEIGHT_BYTES = 4 << 20


def _round_up(n, m):
    return ((n + m - 1) // m) * m


def _pad2d(a, rows, cols):
    r, c = a.shape
    if (r, c) == (rows, cols):
        return a
    return jnp.pad(a, ((0, rows - r), (0, cols - c)))


def value_network_kernel(x_ref, w1_ref, b1_ref, w2_ref, b2_ref, w3_ref, b3_ref,
                         o_ref):
    """One batch tile: relu(x@W1+b1) -> relu(.@W2+b2) -> row-dot with w3 + b3."""
    cdt = w1_ref.dtype                       # MXU operand dtype (bf16 or f32)
    x = x_ref[...].astype(cdt)               # (tile, S), S left unpadded

    # Layers 1/2: MXU matmuls with f32 accumulation; bias + relu on the VPU.
    h1 = jnp.dot(x, w1_ref[...], preferred_element_type=jnp.float32)
    h1 = jnp.maximum(h1 + b1_ref[...].astype(jnp.float32), 0.0)

    h2 = jnp.dot(h1.astype(cdt), w2_ref[...], preferred_element_type=jnp.float32)
    h2 = jnp.maximum(h2 + b2_ref[...].astype(jnp.float32), 0.0)

    # Layer 3 (H -> 1): VPU multiply + lane reduction (keepdims) -> (tile, 1) block.
    # Avoids both a 1-column MXU matmul and a sublane->lane relayout from reshape.
    w3_row = w3_ref[...].astype(jnp.float32)              # [1, H_pad]
    v = jnp.sum(h2 * w3_row, axis=-1, keepdims=True)      # [tile, 1]
    o_ref[...] = (v + b3_ref[0, 0]).astype(o_ref.dtype)


def _default_batch_tile(B):
    """Batch tile: multiple of 128, <= 2048 rows, preferring >= 4 grid steps (so
    v7x's two TensorCores each get >= 2 pipelined steps), then >= 2, else one tile."""
    if B % _LANE != 0:
        return B                              # single full-array tile
    candidates = [t for t in (2048, 1024, 512, 256, 128) if B % t == 0]
    for min_steps in (4, 2):
        for t in candidates:
            if B // t >= min_steps:
                return t
    return B


@functools.lru_cache(maxsize=None)
def _build_value_call(B, S, H_pad, batch_tile, state_dtype, param_dtype,
                      single_buffer_weights):
    """Build (and cache per shape/dtype/tiling) the pallas_call for the forward."""
    num_tiles = B // batch_tile
    psize = jnp.dtype(param_dtype).itemsize
    ssize = jnp.dtype(state_dtype).itemsize

    # VMEM footprint: resident weights, double-buffered state/out tiles, f32 temps.
    weight_bytes = (S * H_pad + H_pad * H_pad + H_pad) * psize + 2 * H_pad * 4
    weight_buf = 1 if single_buffer_weights else 2
    est = (weight_buf * weight_bytes
           + 2 * batch_tile * S * ssize          # state tile (double-buffered)
           + 2 * batch_tile * 4                  # output tile (double-buffered)
           + 3 * batch_tile * H_pad * 4)         # f32 h1/h2/temps
    # 2x headroom, no artificial 32 MiB floor, 48 MiB cap (leave v7x scratch room).
    vmem_limit_bytes = int(min(max(2 * est, 8 << 20), 48 << 20))

    def const_spec(shape):
        # Constant block index -> weights stay resident across the grid.
        if single_buffer_weights:
            return pl.BlockSpec(shape, lambda i: (0, 0),
                                pipeline_mode=pl.Buffered(1))
        return pl.BlockSpec(shape, lambda i: (0, 0))

    in_specs = [
        pl.BlockSpec((batch_tile, S), lambda i: (i, 0)),       # state tile (unpadded)
        const_spec((S, H_pad)),                                # w1
        const_spec((1, H_pad)),                                # b1
        const_spec((H_pad, H_pad)),                            # w2
        const_spec((1, H_pad)),                                # b2
        const_spec((1, H_pad)),                                # w3 row
        pl.BlockSpec(memory_space=pltpu.MemorySpace.SMEM),     # b3 scalar
    ]
    out_spec = pl.BlockSpec((batch_tile, 1), lambda i: (i, 0))

    return pl.pallas_call(
        value_network_kernel,
        out_shape=jax.ShapeDtypeStruct((B, 1), jnp.float32),
        grid_spec=pltpu.PrefetchScalarGridSpec(
            num_scalar_prefetch=0,
            grid=(num_tiles,),
            in_specs=in_specs,
            out_specs=out_spec,
        ),
        compiler_params=pltpu.CompilerParams(
            dimension_semantics=("parallel",),
            vmem_limit_bytes=vmem_limit_bytes,
        ),
    )


def value_network_forward(state, params, *, batch_tile=None):
    """ValueNetwork forward pass via a Pallas TPU kernel.

    state:  [B, state_dim] float32 or bfloat16 (streamed as-is, no padding/cast).
    params: pre-padded / pre-cast params (init_value_network_params or
            prepare_value_network_params):
              w1 [S, H_pad], b1 [1, H_pad], w2 [H_pad, H_pad], b2 [1, H_pad],
              w3_row [1, H_pad], b3 [1, 1]
    Returns [B, 1] float32.
    """
    B, S = state.shape
    H_pad = params["w1"].shape[1]
    assert params["w1"].shape == (S, H_pad), "params not prepared for this state_dim"
    assert params["w2"].shape == (H_pad, H_pad)

    if batch_tile is None:
        batch_tile = _default_batch_tile(B)
    assert B % batch_tile == 0, "batch must be divisible by batch_tile"
    assert batch_tile == B or batch_tile % _SUBLANE == 0, (
        "batch_tile must be a multiple of 8 (or equal to the full batch)")

    # Single-buffer resident weights only when double-buffering them is expensive
    # (big hidden dims on v7x's 64 MiB VMEM); decided once, cached per shape.
    psize = params["w1"].dtype.itemsize
    weight_bytes = (S * H_pad + H_pad * H_pad + H_pad) * psize + 2 * H_pad * 4
    single_buffer = bool(
        hasattr(pl, "Buffered") and 2 * weight_bytes >= _SINGLE_BUFFER_WEIGHT_BYTES)

    call = _build_value_call(B, S, H_pad, batch_tile,
                             jnp.dtype(state.dtype).name,
                             jnp.dtype(params["w1"].dtype).name,
                             single_buffer)
    return call(state, params["w1"], params["b1"], params["w2"], params["b2"],
                params["w3_row"], params["b3"])


def prepare_value_network_params(w1, b1, w2, b2, w3, b3,
                                 *, param_dtype=jnp.bfloat16):
    """Pad / transpose / cast nn.Linear-style parameters ONCE for the kernel.

    Inputs follow PyTorch layout: w1 [H, S], w2 [H, H], w3 [1, H], b* [H] / [1].
    Outputs: weights [in, out] in `param_dtype`, feature dims padded to 128,
    biases float32.  Zero padding is numerically exact (relu(0) = 0).
    """
    H, S = jnp.asarray(w1).shape
    H_pad = _round_up(H, _LANE)
    return {
        "w1": _pad2d(jnp.asarray(w1).T.astype(param_dtype), S, H_pad),
        "b1": _pad2d(jnp.asarray(b1).reshape(1, -1).astype(jnp.float32), 1, H_pad),
        "w2": _pad2d(jnp.asarray(w2).T.astype(param_dtype), H_pad, H_pad),
        "b2": _pad2d(jnp.asarray(b2).reshape(1, -1).astype(jnp.float32), 1, H_pad),
        "w3_row": _pad2d(jnp.asarray(w3).reshape(1, -1).astype(param_dtype), 1, H_pad),
        "b3": jnp.asarray(b3).reshape(1, 1).astype(jnp.float32),
    }


def init_value_network_params(key, state_dim, hidden_dim,
                              *, param_dtype=jnp.bfloat16):
    """nn.Linear-style init U(-1/sqrt(fan_in), 1/sqrt(fan_in)), returned already
    padded / transposed / cast for the kernel (done once, not per forward)."""
    ks = jax.random.split(key, 6)

    def uniform(k, shape, fan_in):
        bound = float(fan_in) ** -0.5
        return jax.random.uniform(k, shape, jnp.float32, -bound, bound)

    w1 = uniform(ks[0], (hidden_dim, state_dim), state_dim)
    b1 = uniform(ks[1], (hidden_dim,), state_dim)
    w2 = uniform(ks[2], (hidden_dim, hidden_dim), hidden_dim)
    b2 = uniform(ks[3], (hidden_dim,), hidden_dim)
    w3 = uniform(ks[4], (1, hidden_dim), hidden_dim)
    b3 = uniform(ks[5], (1,), hidden_dim)
    return prepare_value_network_params(w1, b1, w2, b2, w3, b3,
                                        param_dtype=param_dtype)


def value_network_ref(state, params):
    """Pure-JAX reference mirroring the kernel numerics (low-precision MXU operands,
    float32 accumulation)."""
    cdt = params["w1"].dtype
    f32 = jnp.float32
    h1 = jnp.dot(state.astype(cdt), params["w1"], preferred_element_type=f32)
    h1 = jnp.maximum(h1 + params["b1"].astype(f32), 0.0)
    h2 = jnp.dot(h1.astype(cdt), params["w2"], preferred_element_type=f32)
    h2 = jnp.maximum(h2 + params["b2"].astype(f32), 0.0)
    v = jnp.sum(h2 * params["w3_row"].astype(f32), axis=-1, keepdims=True)
    return v + params["b3"].astype(f32)


if __name__ == "__main__":
    key = jax.random.PRNGKey(0)
    k_params, k_state = jax.random.split(key)

    batch = 512          # -> batch_tile=128, grid=(4,): >=2 pipelined steps per v7x TC
    state_dim = 16
    hidden_dim = 32

    params = init_value_network_params(k_params, state_dim, hidden_dim)
    state = jax.random.normal(k_state, (batch, state_dim), jnp.float32)

    value = jax.block_until_ready(value_network_forward(state, params))
    ref = jax.block_until_ready(value_network_ref(state, params))

    assert value.shape == (batch, 1)
    max_err = float(jnp.max(jnp.abs(value - ref)))
    assert jnp.allclose(value, ref, atol=1e-3, rtol=1e-3), (
        "max abs err: %f" % max_err)

    print("KERNEL_OK")
</pallas_src>

<mosaic_0001>
module attributes {stable_mosaic.version = 11 : i64} {
  func.func @value_network_kernel(%arg0: i32, %arg1: memref<128x16xf32, #tpu.memory_space<vmem>>, %arg2: memref<16x128xbf16, #tpu.memory_space<vmem>>, %arg3: memref<1x128xf32, #tpu.memory_space<vmem>>, %arg4: memref<128x128xbf16, #tpu.memory_space<vmem>>, %arg5: memref<1x128xf32, #tpu.memory_space<vmem>>, %arg6: memref<1x128xbf16, #tpu.memory_space<vmem>>, %arg7: memref<1x1xf32, #tpu.memory_space<smem>>, %arg8: memref<128x1xf32, #tpu.memory_space<vmem>>) attributes {dimension_semantics = [#tpu.dimension_semantics<parallel>], iteration_bounds = array<i64: 4>, scalar_prefetch = 0 : i64, scratch_operands = 0 : i64, tpu.core_type = #tpu.core_type<tc>, window_params = [{transform_indices = @transform_0, window_bounds = array<i64: 128, 16>}, {pipeline_mode = #tpu.pipeline_mode<synchronous>, transform_indices = @transform_1, window_bounds = array<i64: 16, 128>}, {pipeline_mode = #tpu.pipeline_mode<synchronous>, transform_indices = @transform_2, window_bounds = array<i64: 1, 128>}, {pipeline_mode = #tpu.pipeline_mode<synchronous>, transform_indices = @transform_3, window_bounds = array<i64: 128, 128>}, {pipeline_mode = #tpu.pipeline_mode<synchronous>, transform_indices = @transform_4, window_bounds = array<i64: 1, 128>}, {pipeline_mode = #tpu.pipeline_mode<synchronous>, transform_indices = @transform_5, window_bounds = array<i64: 1, 128>}, {transform_indices = @transform_6, window_bounds = array<i64: 1, 1>}, {transform_indices = @transform_7, window_bounds = array<i64: 128, 1>}]} {
    %c0 = arith.constant 0 : index
    %c0_0 = arith.constant 0 : index
    %0 = vector.load %arg1[%c0, %c0_0] : memref<128x16xf32, #tpu.memory_space<vmem>>, vector<128x16xf32>
    %1 = arith.truncf %0 : vector<128x16xf32> to vector<128x16xbf16>
    %c0_1 = arith.constant 0 : index
    %c0_2 = arith.constant 0 : index
    %2 = vector.load %arg2[%c0_1, %c0_2] : memref<16x128xbf16, #tpu.memory_space<vmem>>, vector<16x128xbf16>
    %cst = arith.constant dense<0.000000e+00> : vector<128x128xf32>
    %3 = tpu.matmul %1, %2, %cst {dimension_numbers = #tpu.dot_dimension_numbers<[1], [0], [0], [1], [0, 0, 1, 1], [], []>} : vector<128x16xbf16>, vector<16x128xbf16>, vector<128x128xf32> -> vector<128x128xf32>
    %c0_3 = arith.constant 0 : index
    %c0_4 = arith.constant 0 : index
    %4 = vector.load %arg3[%c0_3, %c0_4] : memref<1x128xf32, #tpu.memory_space<vmem>>, vector<1x128xf32>
    %5 = vector.broadcast %4 : vector<1x128xf32> to vector<128x128xf32>
    %6 = arith.addf %3, %5 : vector<128x128xf32>
    %cst_5 = arith.constant 0.000000e+00 : f32
    %7 = vector.broadcast %cst_5 : f32 to vector<128x128xf32>
    %8 = arith.maximumf %6, %7 : vector<128x128xf32>
    %9 = arith.truncf %8 : vector<128x128xf32> to vector<128x128xbf16>
    %c0_6 = arith.constant 0 : index
    %c0_7 = arith.constant 0 : index
    %10 = vector.load %arg4[%c0_6, %c0_7] : memref<128x128xbf16, #tpu.memory_space<vmem>>, vector<128x128xbf16>
    %cst_8 = arith.constant dense<0.000000e+00> : vector<128x128xf32>
    %11 = tpu.matmul %9, %10, %cst_8 {dimension_numbers = #tpu.dot_dimension_numbers<[1], [0], [0], [1], [0, 0, 1, 1], [], []>} : vector<128x128xbf16>, vector<128x128xbf16>, vector<128x128xf32> -> vector<128x128xf32>
    %c0_9 = arith.constant 0 : index
    %c0_10 = arith.constant 0 : index
    %12 = vector.load %arg5[%c0_9, %c0_10] : memref<1x128xf32, #tpu.memory_space<vmem>>, vector<1x128xf32>
    %13 = vector.broadcast %12 : vector<1x128xf32> to vector<128x128xf32>
    %14 = arith.addf %11, %13 : vector<128x128xf32>
    %cst_11 = arith.constant 0.000000e+00 : f32
    %15 = vector.broadcast %cst_11 : f32 to vector<128x128xf32>
    %16 = arith.maximumf %14, %15 : vector<128x128xf32>
    %c0_12 = arith.constant 0 : index
    %c0_13 = arith.constant 0 : index
    %17 = vector.load %arg6[%c0_12, %c0_13] : memref<1x128xbf16, #tpu.memory_space<vmem>>, vector<1x128xbf16>
    %18 = arith.extf %17 : vector<1x128xbf16> to vector<1x128xf32>
    %19 = vector.broadcast %18 : vector<1x128xf32> to vector<128x128xf32>
    %20 = arith.mulf %16, %19 : vector<128x128xf32>
    %cst_14 = arith.constant dense<0.000000e+00> : vector<128xf32>
    %21 = vector.multi_reduction <add>, %20, %cst_14 [1] : vector<128x128xf32> to vector<128xf32>
    %22 = vector.shape_cast %21 : vector<128xf32> to vector<128x1xf32>
    %c0_15 = arith.constant 0 : index
    %c0_16 = arith.constant 0 : index
    %23 = memref.load %arg7[%c0_15, %c0_16] : memref<1x1xf32, #tpu.memory_space<smem>>
    %24 = vector.broadcast %23 : f32 to vector<128x1xf32>
    %25 = arith.addf %22, %24 : vector<128x1xf32>
    %c0_17 = arith.constant 0 : index
    %c0_18 = arith.constant 0 : index
    %26 = vector.load %arg8[%c0_17, %c0_18] : memref<128x1xf32, #tpu.memory_space<vmem>>, vector<128x1xf32>
    tpu.vector_store %arg8[%c0_17, %c0_18], %25 {strides = array<i32>} : memref<128x1xf32, #tpu.memory_space<vmem>>, vector<128x1xf32>,
    return
  }
  func.func @transform_0(%arg0: i32) -> (i32, i32) {
    %c0_i32 = arith.constant 0 : i32
    %c0_i32_0 = arith.constant 0 : i32
    return %arg0, %c0_i32 : i32, i32
  }
  func.func @transform_1(%arg0: i32) -> (i32, i32) {
    %c0_i32 = arith.constant 0 : i32
    %c0_i32_0 = arith.constant 0 : i32
    %c0_i32_1 = arith.constant 0 : i32
    return %c0_i32, %c0_i32_0 : i32, i32
  }
  func.func @transform_2(%arg0: i32) -> (i32, i32) {
    %c0_i32 = arith.constant 0 : i32
    %c0_i32_0 = arith.constant 0 : i32
    %c0_i32_1 = arith.constant 0 : i32
    return %c0_i32, %c0_i32_0 : i32, i32
  }
  func.func @transform_3(%arg0: i32) -> (i32, i32) {
    %c0_i32 = arith.constant 0 : i32
    %c0_i32_0 = arith.constant 0 : i32
    %c0_i32_1 = arith.constant 0 : i32
    return %c0_i32, %c0_i32_0 : i32, i32
  }
  func.func @transform_4(%arg0: i32) -> (i32, i32) {
    %c0_i32 = arith.constant 0 : i32
    %c0_i32_0 = arith.constant 0 : i32
    %c0_i32_1 = arith.constant 0 : i32
    return %c0_i32, %c0_i32_0 : i32, i32
  }
  func.func @transform_5(%arg0: i32) -> (i32, i32) {
    %c0_i32 = arith.constant 0 : i32
    %c0_i32_0 = arith.constant 0 : i32
    %c0_i32_1 = arith.constant 0 : i32
    return %c0_i32, %c0_i32_0 : i32, i32
  }
  func.func @transform_6(%arg0: i32) -> (i32, i32) {
    %c0_i32 = arith.constant 0 : i32
    %c0_i32_0 = arith.constant 0 : i32
    %c0_i32_1 = arith.constant 0 : i32
    return %c0_i32, %c0_i32_0 : i32, i32
  }
  func.func @transform_7(%arg0: i32) -> (i32, i32) {
    %c0_i32 = arith.constant 0 : i32
    %c0_i32_0 = arith.constant 0 : i32
    return %arg0, %c0_i32 : i32, i32
  }
}

</mosaic_0001>

<llo_original>
// kernel: tpu_custom_call.1
$region0: #{tpu_custom_call.1}
  #allocation0 [shape = 'u32[]', space=smem, size = 0x4, offset = 0x4, fixed_abs, tag = 'smem constant byte address 0x4 - core index']
  #allocation1 [shape = 'u32[144,128]{1,0:T(1,128)}', space=vmem, size = 0x12000, scoped, tag = 'internal scratch']
  #allocation2 [shape = 'f32[1,1]{1,0:T(1,128)S(6)}', space=smem, size = 0x200, scoped, tag = 'scoped memory for tpu_custom_call.1']
  %s0 = inlined_call_operand.vmem [shape: f32[512,16], index: 0, kind: input, shape index: {}]
  %s1 = inlined_call_operand.vmem [shape: bf16[16,128], index: 1, kind: input, shape index: {}]
  %s2 = inlined_call_operand.vmem [shape: f32[1,128], index: 2, kind: input, shape index: {}]
  %s3 = inlined_call_operand.vmem [shape: bf16[128,128], index: 3, kind: input, shape index: {}]
  %s4 = inlined_call_operand.vmem [shape: f32[1,128], index: 4, kind: input, shape index: {}]
  %s5 = inlined_call_operand.vmem [shape: bf16[1,128], index: 5, kind: input, shape index: {}]
  %s6 = inlined_call_operand.<no memory space> [shape: f32[1,1], index: 6, kind: input, shape index: {}]
  %s7 = inlined_call_operand.vmem [shape: f32[512,1], index: 7, kind: output, shape index: {}]
  %s8 = sld [smem:[#allocation0]]
  $region61: #{tpu_custom_call.1} parent=0
    _
  %s10 = ssub.s32 1, %s8
  %s11 = scalar_select 0, %s10, %s8
  %12 = sst [smem:[#allocation2]] %s6
  loop: start=0, step=1, limit=6
  $region2: #{tpu_custom_call.1} parent=0 // loop_pre_header
    _
  $region3: #{tpu_custom_call.1} parent=0 // loop_header
    %s14 = sphi 0, %s18
    %p15 = scmp.ge.s32.totalorder %s14, 6
    %s24 = sphi 0, %s26
    %s27 = sphi 0, %s24
    %s28 = sphi 0, %s27
    %s44 = sphi 0, %s28
    %s48 = sphi 0, %s48
    %s50 = sphi 0, %s48
    %s51 = sphi 0, %s50
    %s65 = sphi 0, %s51
    %s69 = sphi 0, %s69
    %s71 = sphi 0, %s69
    %s72 = sphi 0, %s71
    %s86 = sphi 0, %s72
    %s90 = sphi 0, %s90
    %s92 = sphi 0, %s90
    %s93 = sphi 0, %s92
    %s107 = sphi 0, %s93
    %s111 = sphi 0, %s111
    %s113 = sphi 0, %s111
    %s114 = sphi 0, %s113
    %s128 = sphi 0, %s114
    %s132 = sphi 0, %s132
    %s134 = sphi 0, %s132
    %s135 = sphi 0, %s134
    %s149 = sphi 0, %s135
    %s153 = sphi 0, %s153
    %s155 = sphi 0, %s153
    %s156 = sphi 0, %s155
    %s170 = sphi 0, %s156
    %s176 = sphi 0, %s178
    %s179 = sphi 0, %s176
    %s180 = sphi 0, %s179
    %s196 = sphi 0, %s180
  $region4: #{tpu_custom_call.1} parent=0 // loop_header_branch
    %17 = sbr.rel (%p15) target = $region8
  $region5: #{tpu_custom_call.1} parent=0 // loop_body
    %s19 = ssub.s32 %s14, 1
    %s20 = ssub.s32 %s14, 2
    %s21 = sadd.s32 %s14, 1
    %s22 = ssub.s32 %s14, %s21
    %p23 = scmp.eq.s32.totalorder %s22, 0
    %s25 = sadd.s32 %s24, 1
    %s26 = scalar_select %p23, %s24, %s25
    %p29 = pneg %p23
    %p30 = scmp.eq.s32.totalorder %s14, 3
    %p31 = por %p29, %p30
    %p32 = scmp.ne.s32.totalorder %s24, %s27
    %p33 = scmp.eq.s32.totalorder %s14, 0
    %p34 = por %p32, %p33
    %p35 = scmp.ne.s32.totalorder %s24, %s27
    %p36 = scmp.eq.s32.totalorder %s19, 3
    %p37 = por %p35, %p36
    %p38 = scmp.ne.s32.totalorder %s27, %s28
    %p39 = scmp.eq.s32.totalorder %s19, 0
    %p40 = por %p38, %p39
    %p41 = scmp.ne.s32.totalorder %s27, %s28
    %p42 = scmp.eq.s32.totalorder %s20, 3
    %p43 = por %p41, %p42
    %p45 = scmp.ne.s32.totalorder %s28, %s44
    %p46 = scmp.eq.s32.totalorder %s20, 0
    %p47 = por %p45, %p46
    %s49 = sadd.s32 %s48, 1
    %p52 = scmp.eq.s32.totalorder %s14, 3
    %p53 = scmp.ne.s32.totalorder %s48, %s50
    %p54 = scmp.eq.s32.totalorder %s14, 0
    %p55 = por %p53, %p54
    %p56 = scmp.ne.s32.totalorder %s48, %s50
    %p57 = scmp.eq.s32.totalorder %s19, 3
    %p58 = por %p56, %p57
    %p59 = scmp.ne.s32.totalorder %s50, %s51
    %p60 = scmp.eq.s32.totalorder %s19, 0
    %p61 = por %p59, %p60
    %p62 = scmp.ne.s32.totalorder %s50, %s51
    %p63 = scmp.eq.s32.totalorder %s20, 3
    %p64 = por %p62, %p63
    %p66 = scmp.ne.s32.totalorder %s51, %s65
    %p67 = scmp.eq.s32.totalorder %s20, 0
    %p68 = por %p66, %p67
    %s70 = sadd.s32 %s69, 1
    %p73 = scmp.eq.s32.totalorder %s14, 3
    %p74 = scmp.ne.s32.totalorder %s69, %s71
    %p75 = scmp.eq.s32.totalorder %s14, 0
    %p76 = por %p74, %p75
    %p77 = scmp.ne.s32.totalorder %s69, %s71
    %p78 = scmp.eq.s32.totalorder %s19, 3
    %p79 = por %p77, %p78
    %p80 = scmp.ne.s32.totalorder %s71, %s72
    %p81 = scmp.eq.s32.totalorder %s19, 0
    %p82 = por %p80, %p81
    %p83 = scmp.ne.s32.totalorder %s71, %s72
    %p84 = scmp.eq.s32.totalorder %s20, 3
    %p85 = por %p83, %p84
    %p87 = scmp.ne.s32.totalorder %s72, %s86
    %p88 = scmp.eq.s32.totalorder %s20, 0
    %p89 = por %p87, %p88
    %s91 = sadd.s32 %s90, 1
    %p94 = scmp.eq.s32.totalorder %s14, 3
    %p95 = scmp.ne.s32.totalorder %s90, %s92
    %p96 = scmp.eq.s32.totalorder %s14, 0
    %p97 = por %p95, %p96
    %p98 = scmp.ne.s32.totalorder %s90, %s92
    %p99 = scmp.eq.s32.totalorder %s19, 3
    %p100 = por %p98, %p99
    %p101 = scmp.ne.s32.totalorder %s92, %s93
    %p102 = scmp.eq.s32.totalorder %s19, 0
    %p103 = por %p101, %p102
    %p104 = scmp.ne.s32.totalorder %s92, %s93
    %p105 = scmp.eq.s32.totalorder %s20, 3
    %p106 = por %p104, %p105
    %p108 = scmp.ne.s32.totalorder %s93, %s107
    %p109 = scmp.eq.s32.totalorder %s20, 0
    %p110 = por %p108, %p109
    %s112 = sadd.s32 %s111, 1
    %p115 = scmp.eq.s32.totalorder %s14, 3
    %p116 = scmp.ne.s32.totalorder %s111, %s113
    %p117 = scmp.eq.s32.totalorder %s14, 0
    %p118 = por %p116, %p117
    %p119 = scmp.ne.s32.totalorder %s111, %s113
    %p120 = scmp.eq.s32.totalorder %s19, 3
    %p121 = por %p119, %p120
    %p122 = scmp.ne.s32.totalorder %s113, %s114
    %p123 = scmp.eq.s32.totalorder %s19, 0
    %p124 = por %p122, %p123
    %p125 = scmp.ne.s32.totalorder %s113, %s114
    %p126 = scmp.eq.s32.totalorder %s20, 3
    %p127 = por %p125, %p126
    %p129 = scmp.ne.s32.totalorder %s114, %s128
    %p130 = scmp.eq.s32.totalorder %s20, 0
    %p131 = por %p129, %p130
    %s133 = sadd.s32 %s132, 1
    %p136 = scmp.eq.s32.totalorder %s14, 3
    %p137 = scmp.ne.s32.totalorder %s132, %s134
    %p138 = scmp.eq.s32.totalorder %s14, 0
    %p139 = por %p137, %p138
    %p140 = scmp.ne.s32.totalorder %s132, %s134
    %p141 = scmp.eq.s32.totalorder %s19, 3
    %p142 = por %p140, %p141
    %p143 = scmp.ne.s32.totalorder %s134, %s135
    %p144 = scmp.eq.s32.totalorder %s19, 0
    %p145 = por %p143, %p144
    %p146 = scmp.ne.s32.totalorder %s134, %s135
    %p147 = scmp.eq.s32.totalorder %s20, 3
    %p148 = por %p146, %p147
    %p150 = scmp.ne.s32.totalorder %s135, %s149
    %p151 = scmp.eq.s32.totalorder %s20, 0
    %p152 = por %p150, %p151
    %s154 = sadd.s32 %s153, 1
    %p157 = scmp.eq.s32.totalorder %s14, 3
    %p158 = scmp.ne.s32.totalorder %s153, %s155
    %p159 = scmp.eq.s32.totalorder %s14, 0
    %p160 = por %p158, %p159
    %p161 = scmp.ne.s32.totalorder %s153, %s155
    %p162 = scmp.eq.s32.totalorder %s19, 3
    %p163 = por %p161, %p162
    %p164 = scmp.ne.s32.totalorder %s155, %s156
    %p165 = scmp.eq.s32.totalorder %s19, 0
    %p166 = por %p164, %p165
    %p167 = scmp.ne.s32.totalorder %s155, %s156
    %p168 = scmp.eq.s32.totalorder %s20, 3
    %p169 = por %p167, %p168
    %p171 = scmp.ne.s32.totalorder %s156, %s170
    %p172 = scmp.eq.s32.totalorder %s20, 0
    %p173 = por %p171, %p172
    %s174 = ssub.s32 %s14, %s21
    %p175 = scmp.eq.s32.totalorder %s174, 0
    %s177 = sadd.s32 %s176, 1
    %s178 = scalar_select %p175, %s176, %s177
    %p181 = pneg %p175
    %p182 = scmp.eq.s32.totalorder %s14, 3
    %p183 = por %p181, %p182
    %p184 = scmp.ne.s32.totalorder %s176, %s179
    %p185 = scmp.eq.s32.totalorder %s14, 0
    %p186 = por %p184, %p185
    %p187 = scmp.ne.s32.totalorder %s176, %s179
    %p188 = scmp.eq.s32.totalorder %s19, 3
    %p189 = por %p187, %p188
    %p190 = scmp.ne.s32.totalorder %s179, %s180
    %p191 = scmp.eq.s32.totalorder %s19, 0
    %p192 = por %p190, %p191
    %p193 = scmp.ne.s32.totalorder %s179, %s180
    %p194 = scmp.eq.s32.totalorder %s20, 3
    %p195 = por %p193, %p194
    %p197 = scmp.ne.s32.totalorder %s180, %s196
    %p198 = scmp.eq.s32.totalorder %s20, 0
    %p199 = por %p197, %p198
    %p200 = scmp.le.s32.totalorder 1, %s14
    %p201 = scmp.lt.s32.totalorder %s14, 5
    %p202 = pnand %p200, %p201
    %p203 = pneg %p202
    // Predicated region
    $region9: #{tpu_custom_call.1} parent=5 // pred_check
      _
    $region10: #{tpu_custom_call.1} parent=5 // pred_check_branch
      %205 = sbr.rel (%p202) target = $region12
    $region11: #{tpu_custom_call.1} parent=5 // pred_region
      %s206 = ssub.s32 %s14, 1
      // Predicated region
      $region13: #{tpu_custom_call.1} parent=11 // pred_check
        %p207 = pneg %p61
      $region14: #{tpu_custom_call.1} parent=11 // pred_check_branch
        %209 = sbr.rel (%p207) target = $region16
      $region15: #{tpu_custom_call.1} parent=11 // pred_region
        _
      $region16: #{tpu_custom_call.1} parent=11 // pred_fallthru
        _
      // Predicated region
      $region17: #{tpu_custom_call.1} parent=11 // pred_check
        %p210 = pneg %p82
      $region18: #{tpu_custom_call.1} parent=11 // pred_check_branch
        %212 = sbr.rel (%p210) target = $region20
      $region19: #{tpu_custom_call.1} parent=11 // pred_region
        _
      $region20: #{tpu_custom_call.1} parent=11 // pred_fallthru
        _
      // Predicated region
      $region21: #{tpu_custom_call.1} parent=11 // pred_check
        %p213 = pneg %p103
      $region22: #{tpu_custom_call.1} parent=11 // pred_check_branch
        %215 = sbr.rel (%p213) target = $region24
      $region23: #{tpu_custom_call.1} parent=11 // pred_region
        _
      $region24: #{tpu_custom_call.1} parent=11 // pred_fallthru
        _
      // Predicated region
      $region25: #{tpu_custom_call.1} parent=11 // pred_check
        %p216 = pneg %p124
      $region26: #{tpu_custom_call.1} parent=11 // pred_check_branch
        %218 = sbr.rel (%p216) target = $region28
      $region27: #{tpu_custom_call.1} parent=11 // pred_region
        _
      $region28: #{tpu_custom_call.1} parent=11 // pred_fallthru
        _
      // Predicated region
      $region29: #{tpu_custom_call.1} parent=11 // pred_check
        %p219 = pneg %p145
      $region30: #{tpu_custom_call.1} parent=11 // pred_check_branch
        %221 = sbr.rel (%p219) target = $region32
      $region31: #{tpu_custom_call.1} parent=11 // pred_region
        _
      $region32: #{tpu_custom_call.1} parent=11 // pred_fallthru
        _
      // Predicated region
      $region33: #{tpu_custom_call.1} parent=11 // pred_check
        %p222 = pneg %p166
      $region34: #{tpu_custom_call.1} parent=11 // pred_check_branch
        %224 = sbr.rel (%p222) target = $region36
      $region35: #{tpu_custom_call.1} parent=11 // pred_region
        _
      $region36: #{tpu_custom_call.1} parent=11 // pred_fallthru
        _
    $region12: #{tpu_custom_call.1} parent=5 // pred_fallthru
      _
    %p225 = scmp.lt.s32.totalorder %s14, 4
    // Predicated region
    $region37: #{tpu_custom_call.1} parent=5 // pred_check
      %p226 = pneg %p225
    $region38: #{tpu_custom_call.1} parent=5 // pred_check_branch
      %228 = sbr.rel (%p226) target = $region40
    $region39: #{tpu_custom_call.1} parent=5 // pred_region
      // Predicated region
      $region41: #{tpu_custom_call.1} parent=39 // pred_check
        %p229 = pneg %p34
      $region42: #{tpu_custom_call.1} parent=39 // pred_check_branch
        %231 = sbr.rel (%p229) target = $region44
      $region43: #{tpu_custom_call.1} parent=39 // pred_region
        %s232 = smul.u32 16, %s14
        %p233 = scmp.lt.s32.totalorder %s232, 63
        %s234 = scalar_select %p233, %s232, 63
        %s235 = smul.addr %s234, 8
        %s236 = scalar_lea.vmem %s0, %s235
        %s237 = smul.u32 16, %s14
      $region44: #{tpu_custom_call.1} parent=39 // pred_fallthru
        _
    $region40: #{tpu_custom_call.1} parent=5 // pred_fallthru
      _
    %p238 = scmp.le.s32.totalorder 1, %s14
    %p239 = scmp.lt.s32.totalorder %s14, 5
    %p240 = pnand %p238, %p239
    %p241 = pneg %p240
    // Predicated region
    $region45: #{tpu_custom_call.1} parent=5 // pred_check
      _
    $region46: #{tpu_custom_call.1} parent=5 // pred_check_branch
      %243 = sbr.rel (%p240) target = $region48
    $region47: #{tpu_custom_call.1} parent=5 // pred_region
      %s244 = ssub.s32 %s14, 1
      %s245 = smul.u32 16, %s19
      %p246 = scmp.lt.s32.totalorder %s245, 63
      %s247 = scalar_select %p246, %s245, 63
      %s248 = smul.addr %s247, 8
      %s249 = scalar_lea.vmem %s0, %s248
      %p250 = pneg %p40
      %p251 = pneg %p37
      %p252 = pneg %p61
      %p253 = pneg %p58
      %p254 = pneg %p82
      %p255 = pneg %p79
      %p256 = pneg %p103
      %p257 = pneg %p100
      %p258 = pneg %p124
      %p259 = pneg %p121
      %p260 = pneg %p145
      %p261 = pneg %p142
      %p262 = pneg %p166
      %p263 = pneg %p163
      %p264 = pneg %p192
      %p265 = pneg %p189
      %s266 = smul.u32 16, %s19
      %p267 = scmp.lt.s32.totalorder %s266, 63
      %s268 = scalar_select %p267, %s266, 63
      %s269 = smul.addr %s268, 8
      %s270 = scalar_lea.vmem %s7, %s269
      %s271 = smul.u32 16, %s19
      %p272 = scmp.lt.s32.totalorder %s271, 63
      %s273 = scalar_select %p272, %s271, 63
      %s274 = smul.addr %s273, 8
      %s275 = scalar_lea.vmem %s0, %s274
      %s276 = smul.u32 16, %s19
      %s277 = smul.u32 16, %s19
      %p278 = scmp.lt.s32.totalorder %s277, 63
      %s279 = scalar_select %p278, %s277, 63
      %s280 = smul.addr %s279, 8
      %s281 = scalar_lea.vmem %s7, %s280
      %s282 = smul.u32 16, %s19
      %v284 = vld [vmem:[%s275] sm:$0xff]
      %v285 = vld [vmem:[%s275 + $0x8] sm:$0xff]
      %v286 = vld [vmem:[%s275 + $0x10] sm:$0xff]
      %v287 = vld [vmem:[%s275 + $0x18] sm:$0xff]
      %v288 = vld [vmem:[%s275 + $0x20] sm:$0xff]
      %v289 = vld [vmem:[%s275 + $0x28] sm:$0xff]
      %v290 = vld [vmem:[%s275 + $0x30] sm:$0xff]
      %v291 = vld [vmem:[%s275 + $0x38] sm:$0xff]
      %v292 = vld [vmem:[%s275 + $0x40] sm:$0xff]
      %v293 = vld [vmem:[%s275 + $0x48] sm:$0xff]
      %v294 = vld [vmem:[%s275 + $0x50] sm:$0xff]
      %v295 = vld [vmem:[%s275 + $0x58] sm:$0xff]
      %v296 = vld [vmem:[%s275 + $0x60] sm:$0xff]
      %v297 = vld [vmem:[%s275 + $0x68] sm:$0xff]
      %v298 = vld [vmem:[%s275 + $0x70] sm:$0xff]
      %v299 = vld [vmem:[%s275 + $0x78] sm:$0xff]
      %v300 = vpack.c.bf16 %v285, %v284
      %v301 = vpack.c.bf16 %v287, %v286
      %v302 = vpack.c.bf16 %v289, %v288
      %v303 = vpack.c.bf16 %v291, %v290
      %v304 = vpack.c.bf16 %v293, %v292
      %v305 = vpack.c.bf16 %v295, %v294
      %v306 = vpack.c.bf16 %v297, %v296
      %v307 = vpack.c.bf16 %v299, %v298
      %v308 = vld [vmem:[%s1] sm:$0xf]
      %v309 = vld [vmem:[%s1 + $0x4] sm:$0xf]
      %v310 = vld [vmem:[%s2] sm:$0x1]
      %v312 = vlaneseq
      %v313 = vshrl.u32 %v312, 7
      %v314 = vsub.s32 0, %v313
      %v315 = vrot.slane %v310, %v314
      %v319 = vunpack.c.l.b16 %v308
      %v320 = vunpack.c.l.b16 %v309
      %v321 = vpack.c.b16 %v320, %v319
      %vm323 = vcmask 130048
      %v325 = vsel %vm323, %v300, 0
      %v328 = vsel %vm323, %v301, 0
      %v331 = vsel %vm323, %v302, 0
      %v334 = vsel %vm323, %v303, 0
      %v337 = vsel %vm323, %v304, 0
      %v340 = vsel %vm323, %v305, 0
      %v343 = vsel %vm323, %v306, 0
      %v346 = vsel %vm323, %v307, 0
      %348 = vmatprep.subr.bf16.mxu0 0
      %349 = vmatpush1.bf16.msra.mxu0 %v321
      %350 = vmatprep.subr.bf16.mxu0 0
      %351 = vmatpush1.bf16.msra.mxu0 0
      %352 = vmatprep.subr.bf16.mxu0 0
      %353 = vmatpush1.bf16.msra.mxu0 0
      %354 = vmatprep.subr.bf16.mxu0 0
      %355 = vmatpush1.bf16.msra.mxu0 0
      %356 = vmatprep.subr.bf16.mxu0 0
      %357 = vmatpush1.bf16.msra.mxu0 0
      %358 = vmatprep.subr.bf16.mxu0 0
      %359 = vmatpush1.bf16.msra.mxu0 0
      %360 = vmatprep.subr.bf16.mxu0 0
      %361 = vmatpush1.bf16.msra.mxu0 0
      %362 = vmatprep.subr.bf16.mxu0 0
      %363 = vmatpush1.bf16.msra.mxu0 0
      %364 = vmatprep.subr.bf16.mxu0 0
      %365 = vmatpush1.bf16.msra.mxu0 0
      %366 = vmatprep.subr.bf16.mxu0 0
      %367 = vmatpush1.bf16.msra.mxu0 0
      %368 = vmatprep.subr.bf16.mxu0 0
      %369 = vmatpush1.bf16.msra.mxu0 0
      %370 = vmatprep.subr.bf16.mxu0 0
      %371 = vmatpush1.bf16.msra.mxu0 0
      %372 = vmatprep.subr.bf16.mxu0 0
      %373 = vmatpush1.bf16.msra.mxu0 0
      %374 = vmatprep.subr.bf16.mxu0 0
      %375 = vmatpush1.bf16.msra.mxu0 0
      %376 = vmatprep.subr.bf16.mxu0 0
      %377 = vmatpush1.bf16.msra.mxu0 0
      %378 = vmatprep.subr.bf16.mxu0 0
      %379 = vmatpush1.bf16.msra.mxu0 0
      %380 = vmatprep.mubr.bf16.mxu0 0
      %381 = vmatmul.mubr.bf16.gmra.mrb[0].mxu0 %v325
      %v382 = vpop.f32.mrb[0].mxu0
      %v383 = vadd.f32 %v315, %v382
      %v384 = vpop.f32.mrb[0].mxu0
      %v385 = vpop.f32.mrb[0].mxu0
      %v386 = vadd.f32 %v315, %v385
      %v387 = vpop.f32.mrb[0].mxu0
      %388 = vmatprep.mubr.bf16.mxu0 0
      %389 = vmatmul.mubr.bf16.gmra.mrb[0].mxu0 %v328
      %v390 = vpop.f32.mrb[0].mxu0
      %v391 = vadd.f32 %v315, %v390
      %v392 = vpop.f32.mrb[0].mxu0
      %v393 = vpop.f32.mrb[0].mxu0
      %v394 = vadd.f32 %v315, %v393
      %v395 = vpop.f32.mrb[0].mxu0
      %396 = vmatprep.mubr.bf16.mxu0 0
      %397 = vmatmul.mubr.bf16.gmra.mrb[0].mxu0 %v331
      %v398 = vpop.f32.mrb[0].mxu0
      %v399 = vadd.f32 %v315, %v398
      %v400 = vpop.f32.mrb[0].mxu0
      %v401 = vpop.f32.mrb[0].mxu0
      %v402 = vadd.f32 %v315, %v401
      %v403 = vpop.f32.mrb[0].mxu0
      %404 = vmatprep.mubr.bf16.mxu0 0
      %405 = vmatmul.mubr.bf16.gmra.mrb[0].mxu0 %v334
      %v406 = vpop.f32.mrb[0].mxu0
      %v407 = vadd.f32 %v315, %v406
      %v408 = vpop.f32.mrb[0].mxu0
      %v409 = vpop.f32.mrb[0].mxu0
      %v410 = vadd.f32 %v315, %v409
      %v411 = vpop.f32.mrb[0].mxu0
      %412 = vmatprep.mubr.bf16.mxu0 0
      %413 = vmatmul.mubr.bf16.gmra.mrb[0].mxu0 %v337
      %v414 = vpop.f32.mrb[0].mxu0
      %v415 = vadd.f32 %v315, %v414
      %v416 = vpop.f32.mrb[0].mxu0
      %v417 = vpop.f32.mrb[0].mxu0
      %v418 = vadd.f32 %v315, %v417
      %v419 = vpop.f32.mrb[0].mxu0
      %420 = vmatprep.mubr.bf16.mxu0 0
      %421 = vmatmul.mubr.bf16.gmra.mrb[0].mxu0 %v340
      %v422 = vpop.f32.mrb[0].mxu0
      %v423 = vadd.f32 %v315, %v422
      %v424 = vpop.f32.mrb[0].mxu0
      %v425 = vpop.f32.mrb[0].mxu0
      %v426 = vadd.f32 %v315, %v425
      %v427 = vpop.f32.mrb[0].mxu0
      %428 = vmatprep.mubr.bf16.mxu0 0
      %429 = vmatmul.mubr.bf16.gmra.mrb[0].mxu0 %v343
      %v430 = vpop.f32.mrb[0].mxu0
      %v431 = vadd.f32 %v315, %v430
      %v432 = vpop.f32.mrb[0].mxu0
      %v433 = vpop.f32.mrb[0].mxu0
      %v434 = vadd.f32 %v315, %v433
      %v435 = vpop.f32.mrb[0].mxu0
      %436 = vmatprep.mubr.bf16.mxu0 0
      %437 = vmatmul.mubr.bf16.gmra.mrb[0].mxu0 %v346
      %v438 = vpop.f32.mrb[0].mxu0
      %v439 = vadd.f32 %v315, %v438
      %v440 = vpop.f32.mrb[0].mxu0
      %v441 = vpop.f32.mrb[0].mxu0
      %v442 = vadd.f32 %v315, %v441
      %v443 = vpop.f32.mrb[0].mxu0
      %444 = vdwg.mxu0
      %v445 = vmax.f32 %v383, 0.0
      %v446 = vmax.f32 %v386, 0.0
      %v447 = vmax.f32 %v391, 0.0
      %v448 = vmax.f32 %v394, 0.0
      %v449 = vmax.f32 %v399, 0.0
      %v450 = vmax.f32 %v402, 0.0
      %v451 = vmax.f32 %v407, 0.0
      %v452 = vmax.f32 %v410, 0.0
      %v453 = vmax.f32 %v415, 0.0
      %v454 = vmax.f32 %v418, 0.0
      %v455 = vmax.f32 %v423, 0.0
      %v456 = vmax.f32 %v426, 0.0
      %v457 = vmax.f32 %v431, 0.0
      %v458 = vmax.f32 %v434, 0.0
      %v459 = vmax.f32 %v439, 0.0
      %v460 = vmax.f32 %v442, 0.0
      %v461 = vpack.c.bf16 %v446, %v445
      %v462 = vpack.c.bf16 %v448, %v447
      %v463 = vpack.c.bf16 %v450, %v449
      %v464 = vpack.c.bf16 %v452, %v451
      %v465 = vpack.c.bf16 %v454, %v453
      %v466 = vpack.c.bf16 %v456, %v455
      %v467 = vpack.c.bf16 %v458, %v457
      %v468 = vpack.c.bf16 %v460, %v459
      %v469 = vld [vmem:[%s3] sm:$0xf]
      %v470 = vld [vmem:[%s3 + $0x4] sm:$0xf]
      %v471 = vld [vmem:[%s3 + $0x8] sm:$0xf]
      %v472 = vld [vmem:[%s3 + $0xc] sm:$0xf]
      %v473 = vld [vmem:[%s3 + $0x10] sm:$0xf]
      %v474 = vld [vmem:[%s3 + $0x14] sm:$0xf]
      %v475 = vld [vmem:[%s3 + $0x18] sm:$0xf]
      %v476 = vld [vmem:[%s3 + $0x1c] sm:$0xf]
      %v477 = vld [vmem:[%s3 + $0x20] sm:$0xf]
      %v478 = vld [vmem:[%s3 + $0x24] sm:$0xf]
      %v479 = vld [vmem:[%s3 + $0x28] sm:$0xf]
      %v480 = vld [vmem:[%s3 + $0x2c] sm:$0xf]
      %v481 = vld [vmem:[%s3 + $0x30] sm:$0xf]
      %v482 = vld [vmem:[%s3 + $0x34] sm:$0xf]
      %v483 = vld [vmem:[%s3 + $0x38] sm:$0xf]
      %v484 = vld [vmem:[%s3 + $0x3c] sm:$0xf]
      %v485 = vld [vmem:[%s4] sm:$0x1]
      %v487 = vlaneseq
      %v488 = vshrl.u32 %v487, 7
      %v489 = vsub.s32 0, %v488
      %v490 = vrot.slane %v485, %v489
      %v508 = vunpack.c.l.b16 %v469
      %v509 = vunpack.c.l.b16 %v470
      %v510 = vunpack.c.l.b16 %v471
      %v511 = vunpack.c.l.b16 %v472
      %v512 = vunpack.c.l.b16 %v473
      %v513 = vunpack.c.l.b16 %v474
      %v514 = vunpack.c.l.b16 %v475
      %v515 = vunpack.c.l.b16 %v476
      %v516 = vunpack.c.l.b16 %v477
      %v517 = vunpack.c.l.b16 %v478
      %v518 = vunpack.c.l.b16 %v479
      %v519 = vunpack.c.l.b16 %v480
      %v520 = vunpack.c.l.b16 %v481
      %v521 = vunpack.c.l.b16 %v482
      %v522 = vunpack.c.l.b16 %v483
      %v523 = vunpack.c.l.b16 %v484
      %v524 = vpack.c.b16 %v509, %v508
      %v525 = vpack.c.b16 %v511, %v510
      %v526 = vpack.c.b16 %v513, %v512
      %v527 = vpack.c.b16 %v515, %v514
      %v528 = vpack.c.b16 %v517, %v516
      %v529 = vpack.c.b16 %v519, %v518
      %v530 = vpack.c.b16 %v521, %v520
      %v531 = vpack.c.b16 %v523, %v522
      %540 = vmatprep.subr.bf16.mxu0 0
      %541 = vmatpush1.bf16.msra.mxu0 %v524
      %542 = vmatprep.subr.bf16.mxu0 0
      %543 = vmatpush1.bf16.msra.mxu0 %v525
      %544 = vmatprep.subr.bf16.mxu0 0
      %545 = vmatpush1.bf16.msra.mxu0 %v526
      %546 = vmatprep.subr.bf16.mxu0 0
      %547 = vmatpush1.bf16.msra.mxu0 %v527
      %548 = vmatprep.subr.bf16.mxu0 0
      %549 = vmatpush1.bf16.msra.mxu0 %v528
      %550 = vmatprep.subr.bf16.mxu0 0
      %551 = vmatpush1.bf16.msra.mxu0 %v529
      %552 = vmatprep.subr.bf16.mxu0 0
      %553 = vmatpush1.bf16.msra.mxu0 %v530
      %554 = vmatprep.subr.bf16.mxu0 0
      %555 = vmatpush1.bf16.msra.mxu0 %v531
      %556 = vmatprep.subr.bf16.mxu0 0
      %557 = vmatpush1.bf16.msra.mxu0 0
      %558 = vmatprep.subr.bf16.mxu0 0
      %559 = vmatpush1.bf16.msra.mxu0 0
      %560 = vmatprep.subr.bf16.mxu0 0
      %561 = vmatpush1.bf16.msra.mxu0 0
      %562 = vmatprep.subr.bf16.mxu0 0
      %563 = vmatpush1.bf16.msra.mxu0 0
      %564 = vmatprep.subr.bf16.mxu0 0
      %565 = vmatpush1.bf16.msra.mxu0 0
      %566 = vmatprep.subr.bf16.mxu0 0
      %567 = vmatpush1.bf16.msra.mxu0 0
      %568 = vmatprep.subr.bf16.mxu0 0
      %569 = vmatpush1.bf16.msra.mxu0 0
      %570 = vmatprep.subr.bf16.mxu0 0
      %571 = vmatpush1.bf16.msra.mxu0 0
      %572 = vmatprep.mubr.bf16.mxu0 0
      %573 = vmatmul.mubr.bf16.gmra.mrb[0].mxu0 %v461
      %v574 = vpop.f32.mrb[0].mxu0
      %v575 = vadd.f32 %v490, %v574
      %v576 = vpop.f32.mrb[0].mxu0
      %v577 = vpop.f32.mrb[0].mxu0
      %v578 = vadd.f32 %v490, %v577
      %v579 = vpop.f32.mrb[0].mxu0
      %580 = vmatprep.mubr.bf16.mxu0 0
      %581 = vmatmul.mubr.bf16.gmra.mrb[0].mxu0 %v462
      %v582 = vpop.f32.mrb[0].mxu0
      %v583 = vadd.f32 %v490, %v582
      %v584 = vpop.f32.mrb[0].mxu0
      %v585 = vpop.f32.mrb[0].mxu0
      %v586 = vadd.f32 %v490, %v585
      %v587 = vpop.f32.mrb[0].mxu0
      %588 = vmatprep.mubr.bf16.mxu0 0
      %589 = vmatmul.mubr.bf16.gmra.mrb[0].mxu0 %v463
      %v590 = vpop.f32.mrb[0].mxu0
      %v591 = vadd.f32 %v490, %v590
      %v592 = vpop.f32.mrb[0].mxu0
      %v593 = vpop.f32.mrb[0].mxu0
      %v594 = vadd.f32 %v490, %v593
      %v595 = vpop.f32.mrb[0].mxu0
      %596 = vmatprep.mubr.bf16.mxu0 0
      %597 = vmatmul.mubr.bf16.gmra.mrb[0].mxu0 %v464
      %v598 = vpop.f32.mrb[0].mxu0
      %v599 = vadd.f32 %v490, %v598
      %v600 = vpop.f32.mrb[0].mxu0
      %v601 = vpop.f32.mrb[0].mxu0
      %v602 = vadd.f32 %v490, %v601
      %v603 = vpop.f32.mrb[0].mxu0
      %604 = vmatprep.mubr.bf16.mxu0 0
      %605 = vmatmul.mubr.bf16.gmra.mrb[0].mxu0 %v465
      %v606 = vpop.f32.mrb[0].mxu0
      %v607 = vadd.f32 %v490, %v606
      %v608 = vpop.f32.mrb[0].mxu0
      %v609 = vpop.f32.mrb[0].mxu0
      %v610 = vadd.f32 %v490, %v609
      %v611 = vpop.f32.mrb[0].mxu0
      %612 = vmatprep.mubr.bf16.mxu0 0
      %613 = vmatmul.mubr.bf16.gmra.mrb[0].mxu0 %v466
      %v614 = vpop.f32.mrb[0].mxu0
      %v615 = vadd.f32 %v490, %v614
      %v616 = vpop.f32.mrb[0].mxu0
      %v617 = vpop.f32.mrb[0].mxu0
      %v618 = vadd.f32 %v490, %v617
      %v619 = vpop.f32.mrb[0].mxu0
      %620 = vmatprep.mubr.bf16.mxu0 0
      %621 = vmatmul.mubr.bf16.gmra.mrb[0].mxu0 %v467
      %v622 = vpop.f32.mrb[0].mxu0
      %v623 = vadd.f32 %v490, %v622
      %v624 = vpop.f32.mrb[0].mxu0
      %v625 = vpop.f32.mrb[0].mxu0
      %v626 = vadd.f32 %v490, %v625
      %v627 = vpop.f32.mrb[0].mxu0
      %628 = vmatprep.mubr.bf16.mxu0 0
      %629 = vmatmul.mubr.bf16.gmra.mrb[0].mxu0 %v468
      %v630 = vpop.f32.mrb[0].mxu0
      %v631 = vadd.f32 %v490, %v630
      %v632 = vpop.f32.mrb[0].mxu0
      %v633 = vpop.f32.mrb[0].mxu0
      %v634 = vadd.f32 %v490, %v633
      %v635 = vpop.f32.mrb[0].mxu0
      %636 = vdwg.mxu0
      %v637 = vmax.f32 %v575, 0.0
      %v638 = vmax.f32 %v578, 0.0
      %v639 = vmax.f32 %v583, 0.0
      %v640 = vmax.f32 %v586, 0.0
      %v641 = vmax.f32 %v591, 0.0
      %v642 = vmax.f32 %v594, 0.0
      %v643 = vmax.f32 %v599, 0.0
      %v644 = vmax.f32 %v602, 0.0
      %v645 = vmax.f32 %v607, 0.0
      %v646 = vmax.f32 %v610, 0.0
      %v647 = vmax.f32 %v615, 0.0
      %v648 = vmax.f32 %v618, 0.0
      %v649 = vmax.f32 %v623, 0.0
      %v650 = vmax.f32 %v626, 0.0
      %v651 = vmax.f32 %v631, 0.0
      %v652 = vmax.f32 %v634, 0.0
      %v653 = vld [vmem:[%s5] sm:$0x1]
      %v654 = vunpack.c.l.bf16 %v653
      %v655 = vlaneseq
      %v656 = vshrl.u32 %v655, 7
      %v657 = vsub.s32 0, %v656
      %v658 = vrot.slane %v654, %v657
      %v659 = vmul.f32 %v637, %v658
      %v660 = vmul.f32 %v638, %v658
      %v661 = vmul.f32 %v639, %v658
      %v662 = vmul.f32 %v640, %v658
      %v663 = vmul.f32 %v641, %v658
      %v664 = vmul.f32 %v642, %v658
      %v665 = vmul.f32 %v643, %v658
      %v666 = vmul.f32 %v644, %v658
      %v667 = vmul.f32 %v645, %v658
      %v668 = vmul.f32 %v646, %v658
      %v669 = vmul.f32 %v647, %v658
      %v670 = vmul.f32 %v648, %v658
      %v671 = vmul.f32 %v649, %v658
      %v672 = vmul.f32 %v650, %v658
      %v673 = vmul.f32 %v651, %v658
      %v674 = vmul.f32 %v652, %v658
      %675 = vadd.xlane.f32.xlu0 %v659
      %v676 = vpop.xlane.xlu0 %675
      %677 = vadd.xlane.f32.xlu0 %v660
      %v678 = vpop.xlane.xlu0 %677
      %679 = vadd.xlane.f32.xlu0 %v661
      %v680 = vpop.xlane.xlu0 %679
      %681 = vadd.xlane.f32.xlu0 %v662
      %v682 = vpop.xlane.xlu0 %681
      %683 = vadd.xlane.f32.xlu0 %v663
      %v684 = vpop.xlane.xlu0 %683
      %685 = vadd.xlane.f32.xlu0 %v664
      %v686 = vpop.xlane.xlu0 %685
      %687 = vadd.xlane.f32.xlu0 %v665
      %v688 = vpop.xlane.xlu0 %687
      %689 = vadd.xlane.f32.xlu0 %v666
      %v690 = vpop.xlane.xlu0 %689
      %691 = vadd.xlane.f32.xlu0 %v667
      %v692 = vpop.xlane.xlu0 %691
      %693 = vadd.xlane.f32.xlu0 %v668
      %v694 = vpop.xlane.xlu0 %693
      %695 = vadd.xlane.f32.xlu0 %v669
      %v696 = vpop.xlane.xlu0 %695
      %697 = vadd.xlane.f32.xlu0 %v670
      %v698 = vpop.xlane.xlu0 %697
      %699 = vadd.xlane.f32.xlu0 %v671
      %v700 = vpop.xlane.xlu0 %699
      %701 = vadd.xlane.f32.xlu0 %v672
      %v702 = vpop.xlane.xlu0 %701
      %703 = vadd.xlane.f32.xlu0 %v673
      %v704 = vpop.xlane.xlu0 %703
      %705 = vadd.xlane.f32.xlu0 %v674
      %v706 = vpop.xlane.xlu0 %705
      %s707 = sld [smem:[#allocation2]]
      %v708 = vstv %s707
      %v709 = vadd.f32 %v676, %v708
      %v710 = vadd.f32 %v678, %v708
      %v711 = vadd.f32 %v680, %v708
      %v712 = vadd.f32 %v682, %v708
      %v713 = vadd.f32 %v684, %v708
      %v714 = vadd.f32 %v686, %v708
      %v715 = vadd.f32 %v688, %v708
      %v716 = vadd.f32 %v690, %v708
      %v717 = vadd.f32 %v692, %v708
      %v718 = vadd.f32 %v694, %v708
      %v719 = vadd.f32 %v696, %v708
      %v720 = vadd.f32 %v698, %v708
      %v721 = vadd.f32 %v700, %v708
      %v722 = vadd.f32 %v702, %v708
      %v723 = vadd.f32 %v704, %v708
      %v724 = vadd.f32 %v706, %v708
      %vm725 = vcmask 7168
      %726 = vst.msk [vmem:[%s281] sm:$0xff] %vm725, %v709
      %727 = vst.msk [vmem:[%s281 + $0x8] sm:$0xff] %vm725, %v710
      %728 = vst.msk [vmem:[%s281 + $0x10] sm:$0xff] %vm725, %v711
      %729 = vst.msk [vmem:[%s281 + $0x18] sm:$0xff] %vm725, %v712
      %730 = vst.msk [vmem:[%s281 + $0x20] sm:$0xff] %vm725, %v713
      %731 = vst.msk [vmem:[%s281 + $0x28] sm:$0xff] %vm725, %v714
      %732 = vst.msk [vmem:[%s281 + $0x30] sm:$0xff] %vm725, %v715
      %733 = vst.msk [vmem:[%s281 + $0x38] sm:$0xff] %vm725, %v716
      %734 = vst.msk [vmem:[%s281 + $0x40] sm:$0xff] %vm725, %v717
      %735 = vst.msk [vmem:[%s281 + $0x48] sm:$0xff] %vm725, %v718
      %736 = vst.msk [vmem:[%s281 + $0x50] sm:$0xff] %vm725, %v719
      %737 = vst.msk [vmem:[%s281 + $0x58] sm:$0xff] %vm725, %v720
      %738 = vst.msk [vmem:[%s281 + $0x60] sm:$0xff] %vm725, %v721
      %739 = vst.msk [vmem:[%s281 + $0x68] sm:$0xff] %vm725, %v722
      %740 = vst.msk [vmem:[%s281 + $0x70] sm:$0xff] %vm725, %v723
      %741 = vst.msk [vmem:[%s281 + $0x78] sm:$0xff] %vm725, %v724
      %s742 = smul.u32 16, %s19
      %p743 = scmp.lt.s32.totalorder %s742, 63
      %s744 = scalar_select %p743, %s742, 63
      %s745 = smul.addr %s744, 8
      %s746 = scalar_lea.vmem %s7, %s745
      // Predicated region
      $region49: #{tpu_custom_call.1} parent=47 // pred_check
        %p747 = pneg %p189
      $region50: #{tpu_custom_call.1} parent=47 // pred_check_branch
        %749 = sbr.rel (%p747) target = $region52
      $region51: #{tpu_custom_call.1} parent=47 // pred_region
        %s750 = smul.u32 16, %s19
      $region52: #{tpu_custom_call.1} parent=47 // pred_fallthru
        _
    $region48: #{tpu_custom_call.1} parent=5 // pred_fallthru
      _
    %p751 = scmp.le.s32.totalorder 2, %s14
    // Predicated region
    $region53: #{tpu_custom_call.1} parent=5 // pred_check
      %p752 = pneg %p751
    $region54: #{tpu_custom_call.1} parent=5 // pred_check_branch
      %754 = sbr.rel (%p752) target = $region56
    $region55: #{tpu_custom_call.1} parent=5 // pred_region
      %s755 = ssub.s32 %s14, 2
      // Predicated region
      $region57: #{tpu_custom_call.1} parent=55 // pred_check
        %p756 = pneg %p195
      $region58: #{tpu_custom_call.1} parent=55 // pred_check_branch
        %758 = sbr.rel (%p756) target = $region60
      $region59: #{tpu_custom_call.1} parent=55 // pred_region
        %s759 = smul.u32 16, %s20
        %p760 = scmp.lt.s32.totalorder %s759, 63
        %s761 = scalar_select %p760, %s759, 63
        %s762 = smul.addr %s761, 8
        %s763 = scalar_lea.vmem %s7, %s762
      $region60: #{tpu_custom_call.1} parent=55 // pred_fallthru
        _
    $region56: #{tpu_custom_call.1} parent=5 // pred_fallthru
      _
  $region6: #{tpu_custom_call.1} parent=0 // loop_footer
    %s18 = sadd.s32 1, %s14
  $region7: #{tpu_custom_call.1} parent=0 // loop_footer_branch
    %13 = sbr.rel target = $region3
  $region8: #{tpu_custom_call.1} parent=0 // loop_exit
    _

</llo_original>
